<compile_context>
chip_gen: v7x
topology: tpu7x:2x2x1
jax: 0.10.0
libtpu: 0.0.40
codegen_flags: <defaults>
</compile_context>

<pallas_src>
import functools

import jax
import jax.numpy as jnp
from jax import lax
from jax.experimental import pallas as pl
from jax.experimental.pallas import tpu as pltpu


# ----------------------------- Pallas kernel -------------------------------

def _gcn_layer_kernel(a_ref, x_ref, w_ref, b_ref, o_ref, *, epilogue,
                      n_valid_cols):
    """One fused GCN layer row-tile: o = epilogue(A_tile @ (X @ W) + b).

    a_ref : (TM, Np)   bf16  row tile of the normalized adjacency
    x_ref : (Np, Fin)  bf16  full node features (VMEM-resident)
    w_ref : (Fin, Fout)bf16  full weight matrix (VMEM-resident)
    b_ref : (1, Fout)  f32   bias row
    o_ref : (TM, Fout)       output row tile
    epilogue in {"relu", "log_softmax"} (static).
    """
    # Feature transform; recomputed per row tile (a few MFLOP, i.e. free
    # compared with a separate pallas_call + HBM round trip of XW).
    xw = jnp.dot(x_ref[...], w_ref[...], preferred_element_type=jnp.float32)
    # Aggregation over the full (padded) node axis in one dot: no k grid axis,
    # no accumulator scratch, no init/finalize branches.
    acc = jnp.dot(a_ref[...], xw.astype(jnp.bfloat16),
                  preferred_element_type=jnp.float32)
    acc = acc + b_ref[...]

    if epilogue == "relu":
        acc = jnp.maximum(acc, 0.0)
    elif epilogue == "log_softmax":
        # The whole (padded) class axis is one tile at column offset 0, so a
        # static iota mask is enough (no pl.program_id needed).
        col = lax.broadcasted_iota(jnp.int32, acc.shape, 1)
        acc = jnp.where(col < n_valid_cols, acc, -jnp.inf)
        m = jnp.max(acc, axis=1, keepdims=True)
        z = acc - m
        lse = jnp.log(jnp.sum(jnp.exp(z), axis=1, keepdims=True))
        acc = z - lse

    o_ref[...] = acc.astype(o_ref.dtype)


def gcn_layer(a_hat_p, x_p, w_p, b_p, *, epilogue, n_valid_cols=0,
              out_dtype=jnp.float32, row_tiles=2):
    """Y = epilogue(A_hat_p @ (X_p @ W_p) + b_p), one pallas_call per layer."""
    Np, Np2 = a_hat_p.shape
    assert Np == Np2 and x_p.shape[0] == Np
    Fin = x_p.shape[1]
    Fout = w_p.shape[1]
    assert w_p.shape[0] == Fin and b_p.shape == (1, Fout)
    assert Np % row_tiles == 0
    TM = Np // row_tiles
    assert TM % 8 == 0 and Fout % 128 == 0

    kernel = functools.partial(_gcn_layer_kernel, epilogue=epilogue,
                               n_valid_cols=n_valid_cols)

    flops = 2 * Np * Fin * Fout * row_tiles + 2 * Np * Np * Fout
    transcendentals = Np * Fout if epilogue == "log_softmax" else 0
    bytes_accessed = (a_hat_p.size * a_hat_p.dtype.itemsize
                      + row_tiles * x_p.size * x_p.dtype.itemsize
                      + row_tiles * w_p.size * w_p.dtype.itemsize
                      + row_tiles * b_p.size * 4
                      + Np * Fout * jnp.dtype(out_dtype).itemsize)

    return pl.pallas_call(
        kernel,
        out_shape=jax.ShapeDtypeStruct((Np, Fout), out_dtype),
        grid=(row_tiles,),
        in_specs=[
            pl.BlockSpec((TM, Np), lambda i: (i, 0)),     # A_hat row tile
            pl.BlockSpec((Np, Fin), lambda i: (0, 0)),    # full X
            pl.BlockSpec((Fin, Fout), lambda i: (0, 0)),  # full W
            pl.BlockSpec((1, Fout), lambda i: (0, 0)),    # bias
        ],
        out_specs=pl.BlockSpec((TM, Fout), lambda i: (i, 0)),
        compiler_params=pltpu.CompilerParams(
            dimension_semantics=("parallel",),
            vmem_limit_bytes=32 * 1024 * 1024),
        cost_estimate=pl.CostEstimate(flops=flops,
                                      transcendentals=transcendentals,
                                      bytes_accessed=bytes_accessed),
    )(a_hat_p, x_p, w_p, b_p)


# ------------------------------ JAX glue ------------------------------------

def _round_up(n, m):
    return -(-n // m) * m


def _pad2(x, rows, cols, dtype):
    out = jnp.zeros((rows, cols), dtype)
    return out.at[:x.shape[0], :x.shape[1]].set(x.astype(dtype))


def gcn_forward(a_hat, x, w1, b1, w2, b2, *, lane=128, row_tiles=2):
    """Forward pass of the two-layer GCN (eval mode) with fused Pallas layers."""
    N, F_in = x.shape
    H = w1.shape[1]
    C = w2.shape[1]

    Np = _round_up(N, lane)          # 128-multiple: full lane width, less padding
    Hp = _round_up(H, lane)
    Cp = _round_up(C, lane)

    # bf16 MXU operands; accumulation stays f32 inside the kernel.
    a_p = _pad2(a_hat, Np, Np, jnp.bfloat16)
    x_p = _pad2(x, Np, F_in, jnp.bfloat16)           # F_in left unpadded
    w1_p = _pad2(w1, F_in, Hp, jnp.bfloat16)
    w2_p = _pad2(w2, Hp, Cp, jnp.bfloat16)
    b1_p = _pad2(b1.reshape(1, -1), 1, Hp, jnp.float32)
    b2_p = _pad2(b2.reshape(1, -1), 1, Cp, jnp.float32)

    # ---- layer 1: relu(A_hat @ (X @ W1) + b1), fused in one call ----
    h1 = gcn_layer(a_p, x_p, w1_p, b1_p, epilogue="relu",
                   out_dtype=jnp.bfloat16, row_tiles=row_tiles)
    # F.dropout(x, training=self.training): identity in eval mode.
    # TODO(synk): training-mode dropout would use pltpu.prng_seed / prng_random_bits.

    # ---- layer 2: log_softmax(A_hat @ (H1 @ W2) + b2), fused in one call ----
    out = gcn_layer(a_p, h1, w2_p, b2_p, epilogue="log_softmax",
                    n_valid_cols=C, out_dtype=jnp.float32, row_tiles=row_tiles)

    # TODO(synk): for large sparse graphs, replace dense A_hat with block-sparse
    # tiles skipped via PrefetchScalarGridSpec neighbor-block lists.
    return out[:N, :C]


def build_normalized_adjacency(edge_index, num_nodes):
    """Dense A_hat = D^{-1/2} (A + I) D^{-1/2}, matching torch_geometric GCNConv
    (add_self_loops=True, symmetric normalization, edge_weight = 1)."""
    src, dst = edge_index[0], edge_index[1]
    loop = jnp.arange(num_nodes, dtype=edge_index.dtype)
    src = jnp.concatenate([src, loop])
    dst = jnp.concatenate([dst, loop])
    w = jnp.ones_like(src, dtype=jnp.float32)

    deg = jnp.zeros((num_nodes,), jnp.float32).at[dst].add(w)
    deg_inv_sqrt = jnp.where(deg > 0, 1.0 / jnp.sqrt(deg), 0.0)
    norm = deg_inv_sqrt[src] * deg_inv_sqrt[dst]

    # out[dst] += norm * x[src]  =>  A_hat[dst, src] = norm
    a_hat = jnp.zeros((num_nodes, num_nodes), jnp.float32).at[dst, src].add(norm)
    return a_hat


def glorot(key, shape):
    fan_in, fan_out = shape
    limit = jnp.sqrt(6.0 / (fan_in + fan_out))
    return jax.random.uniform(key, shape, jnp.float32, -limit, limit)


# ------------------------------- main ---------------------------------------

if __name__ == "__main__":
    N = 300          # number of graph nodes (pads to 384 -> two 192-row tiles)
    F_IN = 8         # data.num_node_features
    H = 32           # conv1 output channels
    C = 16           # conv2 output channels

    key = jax.random.PRNGKey(0)
    kx, kw1, kw2 = jax.random.split(key, 3)

    # Node features
    x = jax.random.normal(kx, (N, F_IN), jnp.float32)

    # Ring graph, both directions -> edge_index [2, 2N]
    heads = jnp.arange(N, dtype=jnp.int32)
    tails = (heads + 1) % N
    edge_index = jnp.stack([
        jnp.concatenate([heads, tails]),
        jnp.concatenate([tails, heads]),
    ], axis=0)

    # Deterministic parameters (GCNConv: glorot weight, zero bias)
    w1 = glorot(kw1, (F_IN, H))
    b1 = jnp.zeros((1, H), jnp.float32)
    w2 = glorot(kw2, (H, C))
    b2 = jnp.zeros((1, C), jnp.float32)

    a_hat = build_normalized_adjacency(edge_index, N)

    out = gcn_forward(a_hat, x, w1, b1, w2, b2)
    out = jax.block_until_ready(out)

    # Pure-JAX reference matching the kernel's bf16-operand / f32-accumulate recipe.
    bf = lambda t: t.astype(jnp.bfloat16)
    xw1_r = jnp.dot(bf(x), bf(w1),
                    preferred_element_type=jnp.float32).astype(jnp.bfloat16)
    h1_r = jnp.maximum(
        jnp.dot(bf(a_hat), xw1_r, preferred_element_type=jnp.float32) + b1,
        0.0).astype(jnp.bfloat16)
    xw2_r = jnp.dot(h1_r, bf(w2),
                    preferred_element_type=jnp.float32).astype(jnp.bfloat16)
    logits_r = jnp.dot(bf(a_hat), xw2_r,
                       preferred_element_type=jnp.float32) + b2
    ref = jax.nn.log_softmax(logits_r, axis=1)

    assert out.shape == (N, C)
    assert jnp.allclose(out, ref, atol=5e-2, rtol=5e-2), \
        float(jnp.max(jnp.abs(out - ref)))

    print("KERNEL_OK")
</pallas_src>

<mosaic_0001>
module attributes {stable_mosaic.version = 11 : i64} {
  func.func @_gcn_layer_kernel(%arg0: i32, %arg1: memref<192x384xbf16, #tpu.memory_space<vmem>>, %arg2: memref<384x8xbf16, #tpu.memory_space<vmem>>, %arg3: memref<8x128xbf16, #tpu.memory_space<vmem>>, %arg4: memref<1x128xf32, #tpu.memory_space<vmem>>, %arg5: memref<192x128xbf16, #tpu.memory_space<vmem>>) attributes {dimension_semantics = [#tpu.dimension_semantics<parallel>], iteration_bounds = array<i64: 2>, scalar_prefetch = 0 : i64, scratch_operands = 0 : i64, tpu.core_type = #tpu.core_type<tc>, window_params = [{transform_indices = @transform_0, window_bounds = array<i64: 192, 384>}, {pipeline_mode = #tpu.pipeline_mode<synchronous>, transform_indices = @transform_1, window_bounds = array<i64: 384, 8>}, {pipeline_mode = #tpu.pipeline_mode<synchronous>, transform_indices = @transform_2, window_bounds = array<i64: 8, 128>}, {pipeline_mode = #tpu.pipeline_mode<synchronous>, transform_indices = @transform_3, window_bounds = array<i64: 1, 128>}, {transform_indices = @transform_4, window_bounds = array<i64: 192, 128>}]} {
    %c0 = arith.constant 0 : index
    %c0_0 = arith.constant 0 : index
    %0 = vector.load %arg2[%c0, %c0_0] : memref<384x8xbf16, #tpu.memory_space<vmem>>, vector<384x8xbf16>
    %c0_1 = arith.constant 0 : index
    %c0_2 = arith.constant 0 : index
    %1 = vector.load %arg3[%c0_1, %c0_2] : memref<8x128xbf16, #tpu.memory_space<vmem>>, vector<8x128xbf16>
    %cst = arith.constant dense<0.000000e+00> : vector<384x128xf32>
    %2 = tpu.matmul %0, %1, %cst {dimension_numbers = #tpu.dot_dimension_numbers<[1], [0], [0], [1], [0, 0, 1, 1], [], []>} : vector<384x8xbf16>, vector<8x128xbf16>, vector<384x128xf32> -> vector<384x128xf32>
    %c0_3 = arith.constant 0 : index
    %c0_4 = arith.constant 0 : index
    %3 = vector.load %arg1[%c0_3, %c0_4] : memref<192x384xbf16, #tpu.memory_space<vmem>>, vector<192x384xbf16>
    %4 = arith.truncf %2 : vector<384x128xf32> to vector<384x128xbf16>
    %cst_5 = arith.constant dense<0.000000e+00> : vector<192x128xf32>
    %5 = tpu.matmul %3, %4, %cst_5 {dimension_numbers = #tpu.dot_dimension_numbers<[1], [0], [0], [1], [0, 0, 1, 1], [], []>} : vector<192x384xbf16>, vector<384x128xbf16>, vector<192x128xf32> -> vector<192x128xf32>
    %c0_6 = arith.constant 0 : index
    %c0_7 = arith.constant 0 : index
    %6 = vector.load %arg4[%c0_6, %c0_7] : memref<1x128xf32, #tpu.memory_space<vmem>>, vector<1x128xf32>
    %7 = vector.broadcast %6 : vector<1x128xf32> to vector<192x128xf32>
    %8 = arith.addf %5, %7 : vector<192x128xf32>
    %cst_8 = arith.constant 0.000000e+00 : f32
    %9 = vector.broadcast %cst_8 : f32 to vector<192x128xf32>
    %10 = arith.maximumf %8, %9 : vector<192x128xf32>
    %11 = arith.truncf %10 : vector<192x128xf32> to vector<192x128xbf16>
    %c0_9 = arith.constant 0 : index
    %c0_10 = arith.constant 0 : index
    %12 = vector.load %arg5[%c0_9, %c0_10] : memref<192x128xbf16, #tpu.memory_space<vmem>>, vector<192x128xbf16>
    tpu.vector_store %arg5[%c0_9, %c0_10], %11 {strides = array<i32>} : memref<192x128xbf16, #tpu.memory_space<vmem>>, vector<192x128xbf16>,
    return
  }
  func.func @transform_0(%arg0: i32) -> (i32, i32) {
    %c0_i32 = arith.constant 0 : i32
    %c0_i32_0 = arith.constant 0 : i32
    return %arg0, %c0_i32 : i32, i32
  }
  func.func @transform_1(%arg0: i32) -> (i32, i32) {
    %c0_i32 = arith.constant 0 : i32
    %c0_i32_0 = arith.constant 0 : i32
    %c0_i32_1 = arith.constant 0 : i32
    return %c0_i32, %c0_i32_0 : i32, i32
  }
  func.func @transform_2(%arg0: i32) -> (i32, i32) {
    %c0_i32 = arith.constant 0 : i32
    %c0_i32_0 = arith.constant 0 : i32
    %c0_i32_1 = arith.constant 0 : i32
    return %c0_i32, %c0_i32_0 : i32, i32
  }
  func.func @transform_3(%arg0: i32) -> (i32, i32) {
    %c0_i32 = arith.constant 0 : i32
    %c0_i32_0 = arith.constant 0 : i32
    %c0_i32_1 = arith.constant 0 : i32
    return %c0_i32, %c0_i32_0 : i32, i32
  }
  func.func @transform_4(%arg0: i32) -> (i32, i32) {
    %c0_i32 = arith.constant 0 : i32
    %c0_i32_0 = arith.constant 0 : i32
    return %arg0, %c0_i32 : i32, i32
  }
}

</mosaic_0001>

<llo_original>
// kernel: tpu_custom_call.1
$region0: #{tpu_custom_call.1}
  #allocation0 [shape = 'u32[]', space=smem, size = 0x4, offset = 0x4, fixed_abs, tag = 'smem constant byte address 0x4 - core index']
  #allocation1 [shape = 'u32[144,128]{1,0:T(1,128)}', space=vmem, size = 0x12000, scoped, tag = 'internal scratch']
  %s0 = inlined_call_operand.hbm [shape: bf16[384,384], index: 0, kind: input, shape index: {}]
  %s1 = inlined_call_operand.vmem [shape: bf16[384,8], index: 1, kind: input, shape index: {}]
  %s2 = inlined_call_operand.vmem [shape: bf16[8,128], index: 2, kind: input, shape index: {}]
  %s3 = inlined_call_operand.vmem [shape: f32[1,128], index: 3, kind: input, shape index: {}]
  %s4 = inlined_call_operand.hbm [shape: bf16[384,128], index: 4, kind: output, shape index: {}]
  %s5 = sld [smem:[#allocation0]]
  $region53: #{tpu_custom_call.1} parent=0
    _
  %s7 = ssub.s32 1, %s5
  %s8 = scalar_select 0, %s7, %s5
  $region1: #{tpu_custom_call.1} parent=0
    #allocation2 [shape = 'u8[294912]{0}', space=vmem, size = 0x48000, scoped, tag = 'input window, operand 0']
    #allocation3 [shape = 's32[2]{0}', space=sflag, size = 0x8, scoped, tag = 'scoped memory for tpu_custom_call.1']
    #allocation4 [shape = 's32[2]{0}', space=sflag, size = 0x8, scoped, tag = 'scoped memory for tpu_custom_call.1']
    #allocation5 [shape = 'u8[98304]{0}', space=vmem, size = 0x18000, scoped, tag = 'output window, operand 0']
    %9 = vsyncpa [#allocation3], 0
    %s10 = scalar_lea.sflag [#allocation3], 1
    %11 = vsyncpa %s10, 0
    %12 = vsyncpa [#allocation4], 0
    %s13 = scalar_lea.sflag [#allocation4], 1
    %14 = vsyncpa %s13, 0
    loop: start=0, step=1, limit=4
    $region2: #{tpu_custom_call.1} parent=1 // loop_pre_header
      _
    $region3: #{tpu_custom_call.1} parent=1 // loop_header
      %s16 = sphi 0, %s20
      %p17 = scmp.ge.s32.totalorder %s16, 4
      %s26 = sphi 0, %s28
      %s29 = sphi 0, %s26
      %s30 = sphi 0, %s29
      %s46 = sphi 0, %s30
      %s50 = sphi 0, %s50
      %s52 = sphi 0, %s50
      %s53 = sphi 0, %s52
      %s67 = sphi 0, %s53
      %s71 = sphi 0, %s71
      %s73 = sphi 0, %s71
      %s74 = sphi 0, %s73
      %s88 = sphi 0, %s74
      %s92 = sphi 0, %s92
      %s94 = sphi 0, %s92
      %s95 = sphi 0, %s94
      %s109 = sphi 0, %s95
      %s115 = sphi 0, %s117
      %s118 = sphi 0, %s115
      %s119 = sphi 0, %s118
      %s135 = sphi 0, %s119
    $region4: #{tpu_custom_call.1} parent=1 // loop_header_branch
      %19 = sbr.rel (%p17) target = $region8
    $region5: #{tpu_custom_call.1} parent=1 // loop_body
      %s21 = ssub.s32 %s16, 1
      %s22 = ssub.s32 %s16, 2
      %s23 = sadd.s32 %s16, 1
      %s24 = ssub.s32 %s16, %s23
      %p25 = scmp.eq.s32.totalorder %s24, 0
      %s27 = sadd.s32 %s26, 1
      %s28 = scalar_select %p25, %s26, %s27
      %p31 = pneg %p25
      %p32 = scmp.eq.s32.totalorder %s16, 1
      %p33 = por %p31, %p32
      %p34 = scmp.ne.s32.totalorder %s26, %s29
      %p35 = scmp.eq.s32.totalorder %s16, 0
      %p36 = por %p34, %p35
      %p37 = scmp.ne.s32.totalorder %s26, %s29
      %p38 = scmp.eq.s32.totalorder %s21, 1
      %p39 = por %p37, %p38
      %p40 = scmp.ne.s32.totalorder %s29, %s30
      %p41 = scmp.eq.s32.totalorder %s21, 0
      %p42 = por %p40, %p41
      %p43 = scmp.ne.s32.totalorder %s29, %s30
      %p44 = scmp.eq.s32.totalorder %s22, 1
      %p45 = por %p43, %p44
      %p47 = scmp.ne.s32.totalorder %s30, %s46
      %p48 = scmp.eq.s32.totalorder %s22, 0
      %p49 = por %p47, %p48
      %s51 = sadd.s32 %s50, 1
      %p54 = scmp.eq.s32.totalorder %s16, 1
      %p55 = scmp.ne.s32.totalorder %s50, %s52
      %p56 = scmp.eq.s32.totalorder %s16, 0
      %p57 = por %p55, %p56
      %p58 = scmp.ne.s32.totalorder %s50, %s52
      %p59 = scmp.eq.s32.totalorder %s21, 1
      %p60 = por %p58, %p59
      %p61 = scmp.ne.s32.totalorder %s52, %s53
      %p62 = scmp.eq.s32.totalorder %s21, 0
      %p63 = por %p61, %p62
      %p64 = scmp.ne.s32.totalorder %s52, %s53
      %p65 = scmp.eq.s32.totalorder %s22, 1
      %p66 = por %p64, %p65
      %p68 = scmp.ne.s32.totalorder %s53, %s67
      %p69 = scmp.eq.s32.totalorder %s22, 0
      %p70 = por %p68, %p69
      %s72 = sadd.s32 %s71, 1
      %p75 = scmp.eq.s32.totalorder %s16, 1
      %p76 = scmp.ne.s32.totalorder %s71, %s73
      %p77 = scmp.eq.s32.totalorder %s16, 0
      %p78 = por %p76, %p77
      %p79 = scmp.ne.s32.totalorder %s71, %s73
      %p80 = scmp.eq.s32.totalorder %s21, 1
      %p81 = por %p79, %p80
      %p82 = scmp.ne.s32.totalorder %s73, %s74
      %p83 = scmp.eq.s32.totalorder %s21, 0
      %p84 = por %p82, %p83
      %p85 = scmp.ne.s32.totalorder %s73, %s74
      %p86 = scmp.eq.s32.totalorder %s22, 1
      %p87 = por %p85, %p86
      %p89 = scmp.ne.s32.totalorder %s74, %s88
      %p90 = scmp.eq.s32.totalorder %s22, 0
      %p91 = por %p89, %p90
      %s93 = sadd.s32 %s92, 1
      %p96 = scmp.eq.s32.totalorder %s16, 1
      %p97 = scmp.ne.s32.totalorder %s92, %s94
      %p98 = scmp.eq.s32.totalorder %s16, 0
      %p99 = por %p97, %p98
      %p100 = scmp.ne.s32.totalorder %s92, %s94
      %p101 = scmp.eq.s32.totalorder %s21, 1
      %p102 = por %p100, %p101
      %p103 = scmp.ne.s32.totalorder %s94, %s95
      %p104 = scmp.eq.s32.totalorder %s21, 0
      %p105 = por %p103, %p104
      %p106 = scmp.ne.s32.totalorder %s94, %s95
      %p107 = scmp.eq.s32.totalorder %s22, 1
      %p108 = por %p106, %p107
      %p110 = scmp.ne.s32.totalorder %s95, %s109
      %p111 = scmp.eq.s32.totalorder %s22, 0
      %p112 = por %p110, %p111
      %s113 = ssub.s32 %s16, %s23
      %p114 = scmp.eq.s32.totalorder %s113, 0
      %s116 = sadd.s32 %s115, 1
      %s117 = scalar_select %p114, %s115, %s116
      %p120 = pneg %p114
      %p121 = scmp.eq.s32.totalorder %s16, 1
      %p122 = por %p120, %p121
      %p123 = scmp.ne.s32.totalorder %s115, %s118
      %p124 = scmp.eq.s32.totalorder %s16, 0
      %p125 = por %p123, %p124
      %p126 = scmp.ne.s32.totalorder %s115, %s118
      %p127 = scmp.eq.s32.totalorder %s21, 1
      %p128 = por %p126, %p127
      %p129 = scmp.ne.s32.totalorder %s118, %s119
      %p130 = scmp.eq.s32.totalorder %s21, 0
      %p131 = por %p129, %p130
      %p132 = scmp.ne.s32.totalorder %s118, %s119
      %p133 = scmp.eq.s32.totalorder %s22, 1
      %p134 = por %p132, %p133
      %p136 = scmp.ne.s32.totalorder %s119, %s135
      %p137 = scmp.eq.s32.totalorder %s22, 0
      %p138 = por %p136, %p137
      %p139 = scmp.le.s32.totalorder 1, %s16
      %p140 = scmp.lt.s32.totalorder %s16, 3
      %p141 = pnand %p139, %p140
      %p142 = pneg %p141
      // Predicated region
      $region9: #{tpu_custom_call.1} parent=5 // pred_check
        _
      $region10: #{tpu_custom_call.1} parent=5 // pred_check_branch
        %144 = sbr.rel (%p141) target = $region12
      $region11: #{tpu_custom_call.1} parent=5 // pred_region
        %s145 = ssub.s32 %s16, 1
        // Predicated region
        $region13: #{tpu_custom_call.1} parent=11 // pred_check
          %p146 = pneg %p63
        $region14: #{tpu_custom_call.1} parent=11 // pred_check_branch
          %148 = sbr.rel (%p146) target = $region16
        $region15: #{tpu_custom_call.1} parent=11 // pred_region
          _
        $region16: #{tpu_custom_call.1} parent=11 // pred_fallthru
          _
        // Predicated region
        $region17: #{tpu_custom_call.1} parent=11 // pred_check
          %p149 = pneg %p84
        $region18: #{tpu_custom_call.1} parent=11 // pred_check_branch
          %151 = sbr.rel (%p149) target = $region20
        $region19: #{tpu_custom_call.1} parent=11 // pred_region
          _
        $region20: #{tpu_custom_call.1} parent=11 // pred_fallthru
          _
        // Predicated region
        $region21: #{tpu_custom_call.1} parent=11 // pred_check
          %p152 = pneg %p105
        $region22: #{tpu_custom_call.1} parent=11 // pred_check_branch
          %154 = sbr.rel (%p152) target = $region24
        $region23: #{tpu_custom_call.1} parent=11 // pred_region
          _
        $region24: #{tpu_custom_call.1} parent=11 // pred_fallthru
          _
      $region12: #{tpu_custom_call.1} parent=5 // pred_fallthru
        _
      %p155 = scmp.lt.s32.totalorder %s16, 2
      // Predicated region
      $region25: #{tpu_custom_call.1} parent=5 // pred_check
        %p156 = pneg %p155
      $region26: #{tpu_custom_call.1} parent=5 // pred_check_branch
        %158 = sbr.rel (%p156) target = $region28
      $region27: #{tpu_custom_call.1} parent=5 // pred_region
        // Predicated region
        $region29: #{tpu_custom_call.1} parent=27 // pred_check
          %p159 = pneg %p36
        $region30: #{tpu_custom_call.1} parent=27 // pred_check_branch
          %161 = sbr.rel (%p159) target = $region32
        $region31: #{tpu_custom_call.1} parent=27 // pred_region
          %s162 = sand.u32 %s26, 1
          %s163 = scalar_lea.sflag [#allocation3], %s162
          %s164 = sand.u32 %s26, 1
          %s165 = smul.addr %s164, 288
          %s166 = scalar_lea.vmem [#allocation2], %s165
          %s167 = smul.u32 24, %s16
          %s169 = ssub.s32 4608, 4608
          %170 = vsyncadd %s163, %s169
          %s171 = smul.addr %s167, 3
          %s172 = smul.addr %s171, 64
          %s173 = scalar_lea.hbm %s0, %s172
          %s174 = sshll.u32 %s166, 4
          %s175 = int_to_ptr.vmem [resolvable:$true] %s174
          %180 = dma.hbm_to_vmem [thread:$0]  %s173, 4608, %s175, %s163, 192, 192, 12
        $region32: #{tpu_custom_call.1} parent=27 // pred_fallthru
          _
      $region28: #{tpu_custom_call.1} parent=5 // pred_fallthru
        _
      %p181 = scmp.le.s32.totalorder 1, %s16
      %p182 = scmp.lt.s32.totalorder %s16, 3
      %p183 = pnand %p181, %p182
      %p184 = pneg %p183
      // Predicated region
      $region33: #{tpu_custom_call.1} parent=5 // pred_check
        _
      $region34: #{tpu_custom_call.1} parent=5 // pred_check_branch
        %186 = sbr.rel (%p183) target = $region36
      $region35: #{tpu_custom_call.1} parent=5 // pred_region
        %s187 = ssub.s32 %s16, 1
        %s188 = sand.u32 %s29, 1
        %s189 = scalar_lea.sflag [#allocation3], %s188
        %s190 = sand.u32 %s29, 1
        %s191 = smul.addr %s190, 288
        %s192 = scalar_lea.vmem [#allocation2], %s191
        // Predicated region
        $region37: #{tpu_custom_call.1} parent=35 // pred_check
          %p193 = pneg %p42
        $region38: #{tpu_custom_call.1} parent=35 // pred_check_branch
          %195 = sbr.rel (%p193) target = $region40
        $region39: #{tpu_custom_call.1} parent=35 // pred_region
          %196 = dma.done %s189, 4608
        $region40: #{tpu_custom_call.1} parent=35 // pred_fallthru
          _
        %s197 = sand.u32 %s29, 1
        %s198 = scalar_lea.sflag [#allocation3], %s197
        %s199 = sand.u32 %s29, 1
        %s200 = smul.addr %s199, 288
        %s201 = scalar_lea.vmem [#allocation2], %s200
        %p202 = pneg %p42
        %p203 = pneg %p39
        %p204 = pneg %p63
        %p205 = pneg %p60
        %p206 = pneg %p84
        %p207 = pneg %p81
        %p208 = pneg %p105
        %p209 = pneg %p102
        %p210 = pneg %p131
        %p211 = pneg %p128
        %s212 = sand.u32 %s118, 1
        %s213 = scalar_lea.sflag [#allocation4], %s212
        %s214 = sand.u32 %s118, 1
        %s215 = smul.addr %s214, 96
        %s216 = scalar_lea.vmem [#allocation5], %s215
        %s217 = smul.u32 24, %s21
        %s218 = smul.u32 24, %s21
        %v220 = vld [vmem:[%s1] sm:$0xf]
        %v221 = vld [vmem:[%s1 + $0x4] sm:$0xf]
        %v222 = vld [vmem:[%s1 + $0x8] sm:$0xf]
        %v223 = vld [vmem:[%s1 + $0xc] sm:$0xf]
        %v224 = vld [vmem:[%s1 + $0x10] sm:$0xf]
        %v225 = vld [vmem:[%s1 + $0x14] sm:$0xf]
        %v226 = vld [vmem:[%s1 + $0x18] sm:$0xf]
        %v227 = vld [vmem:[%s1 + $0x1c] sm:$0xf]
        %v228 = vld [vmem:[%s1 + $0x20] sm:$0xf]
        %v229 = vld [vmem:[%s1 + $0x24] sm:$0xf]
        %v230 = vld [vmem:[%s1 + $0x28] sm:$0xf]
        %v231 = vld [vmem:[%s1 + $0x2c] sm:$0xf]
        %v232 = vld [vmem:[%s1 + $0x30] sm:$0xf]
        %v233 = vld [vmem:[%s1 + $0x34] sm:$0xf]
        %v234 = vld [vmem:[%s1 + $0x38] sm:$0xf]
        %v235 = vld [vmem:[%s1 + $0x3c] sm:$0xf]
        %v236 = vld [vmem:[%s1 + $0x40] sm:$0xf]
        %v237 = vld [vmem:[%s1 + $0x44] sm:$0xf]
        %v238 = vld [vmem:[%s1 + $0x48] sm:$0xf]
        %v239 = vld [vmem:[%s1 + $0x4c] sm:$0xf]
        %v240 = vld [vmem:[%s1 + $0x50] sm:$0xf]
        %v241 = vld [vmem:[%s1 + $0x54] sm:$0xf]
        %v242 = vld [vmem:[%s1 + $0x58] sm:$0xf]
        %v243 = vld [vmem:[%s1 + $0x5c] sm:$0xf]
        %v244 = vld [vmem:[%s1 + $0x60] sm:$0xf]
        %v245 = vld [vmem:[%s1 + $0x64] sm:$0xf]
        %v246 = vld [vmem:[%s1 + $0x68] sm:$0xf]
        %v247 = vld [vmem:[%s1 + $0x6c] sm:$0xf]
        %v248 = vld [vmem:[%s1 + $0x70] sm:$0xf]
        %v249 = vld [vmem:[%s1 + $0x74] sm:$0xf]
        %v250 = vld [vmem:[%s1 + $0x78] sm:$0xf]
        %v251 = vld [vmem:[%s1 + $0x7c] sm:$0xf]
        %v252 = vld [vmem:[%s1 + $0x80] sm:$0xf]
        %v253 = vld [vmem:[%s1 + $0x84] sm:$0xf]
        %v254 = vld [vmem:[%s1 + $0x88] sm:$0xf]
        %v255 = vld [vmem:[%s1 + $0x8c] sm:$0xf]
        %v256 = vld [vmem:[%s1 + $0x90] sm:$0xf]
        %v257 = vld [vmem:[%s1 + $0x94] sm:$0xf]
        %v258 = vld [vmem:[%s1 + $0x98] sm:$0xf]
        %v259 = vld [vmem:[%s1 + $0x9c] sm:$0xf]
        %v260 = vld [vmem:[%s1 + $0xa0] sm:$0xf]
        %v261 = vld [vmem:[%s1 + $0xa4] sm:$0xf]
        %v262 = vld [vmem:[%s1 + $0xa8] sm:$0xf]
        %v263 = vld [vmem:[%s1 + $0xac] sm:$0xf]
        %v264 = vld [vmem:[%s1 + $0xb0] sm:$0xf]
        %v265 = vld [vmem:[%s1 + $0xb4] sm:$0xf]
        %v266 = vld [vmem:[%s1 + $0xb8] sm:$0xf]
        %v267 = vld [vmem:[%s1 + $0xbc] sm:$0xf]
        %v268 = vld [vmem:[%s2] sm:$0xf]
        %v317 = vunpack.c.l.b16 %v220
        %v318 = vunpack.c.l.b16 %v221
        %v319 = vunpack.c.l.b16 %v222
        %v320 = vunpack.c.l.b16 %v223
        %v321 = vunpack.c.l.b16 %v224
        %v322 = vunpack.c.l.b16 %v225
        %v323 = vunpack.c.l.b16 %v226
        %v324 = vunpack.c.l.b16 %v227
        %v325 = vunpack.c.l.b16 %v228
        %v326 = vunpack.c.l.b16 %v229
        %v327 = vunpack.c.l.b16 %v230
        %v328 = vunpack.c.l.b16 %v231
        %v329 = vunpack.c.l.b16 %v232
        %v330 = vunpack.c.l.b16 %v233
        %v331 = vunpack.c.l.b16 %v234
        %v332 = vunpack.c.l.b16 %v235
        %v333 = vunpack.c.l.b16 %v236
        %v334 = vunpack.c.l.b16 %v237
        %v335 = vunpack.c.l.b16 %v238
        %v336 = vunpack.c.l.b16 %v239
        %v337 = vunpack.c.l.b16 %v240
        %v338 = vunpack.c.l.b16 %v241
        %v339 = vunpack.c.l.b16 %v242
        %v340 = vunpack.c.l.b16 %v243
        %v341 = vunpack.c.l.b16 %v244
        %v342 = vunpack.c.l.b16 %v245
        %v343 = vunpack.c.l.b16 %v246
        %v344 = vunpack.c.l.b16 %v247
        %v345 = vunpack.c.l.b16 %v248
        %v346 = vunpack.c.l.b16 %v249
        %v347 = vunpack.c.l.b16 %v250
        %v348 = vunpack.c.l.b16 %v251
        %v349 = vunpack.c.l.b16 %v252
        %v350 = vunpack.c.l.b16 %v253
        %v351 = vunpack.c.l.b16 %v254
        %v352 = vunpack.c.l.b16 %v255
        %v353 = vunpack.c.l.b16 %v256
        %v354 = vunpack.c.l.b16 %v257
        %v355 = vunpack.c.l.b16 %v258
        %v356 = vunpack.c.l.b16 %v259
        %v357 = vunpack.c.l.b16 %v260
        %v358 = vunpack.c.l.b16 %v261
        %v359 = vunpack.c.l.b16 %v262
        %v360 = vunpack.c.l.b16 %v263
        %v361 = vunpack.c.l.b16 %v264
        %v362 = vunpack.c.l.b16 %v265
        %v363 = vunpack.c.l.b16 %v266
        %v364 = vunpack.c.l.b16 %v267
        %v365 = vpack.c.b16 %v318, %v317
        %v366 = vpack.c.b16 %v320, %v319
        %v367 = vpack.c.b16 %v322, %v321
        %v368 = vpack.c.b16 %v324, %v323
        %v369 = vpack.c.b16 %v326, %v325
        %v370 = vpack.c.b16 %v328, %v327
        %v371 = vpack.c.b16 %v330, %v329
        %v372 = vpack.c.b16 %v332, %v331
        %v373 = vpack.c.b16 %v334, %v333
        %v374 = vpack.c.b16 %v336, %v335
        %v375 = vpack.c.b16 %v338, %v337
        %v376 = vpack.c.b16 %v340, %v339
        %v377 = vpack.c.b16 %v342, %v341
        %v378 = vpack.c.b16 %v344, %v343
        %v379 = vpack.c.b16 %v346, %v345
        %v380 = vpack.c.b16 %v348, %v347
        %v381 = vpack.c.b16 %v350, %v349
        %v382 = vpack.c.b16 %v352, %v351
        %v383 = vpack.c.b16 %v354, %v353
        %v384 = vpack.c.b16 %v356, %v355
        %v385 = vpack.c.b16 %v358, %v357
        %v386 = vpack.c.b16 %v360, %v359
        %v387 = vpack.c.b16 %v362, %v361
        %v388 = vpack.c.b16 %v364, %v363
        %vm389 = vcmask 64512
        %v391 = vsel %vm389, %v365, 0
        %v394 = vsel %vm389, %v366, 0
        %v397 = vsel %vm389, %v367, 0
        %v400 = vsel %vm389, %v368, 0
        %v403 = vsel %vm389, %v369, 0
        %v406 = vsel %vm389, %v370, 0
        %v409 = vsel %vm389, %v371, 0
        %v412 = vsel %vm389, %v372, 0
        %v415 = vsel %vm389, %v373, 0
        %v418 = vsel %vm389, %v374, 0
        %v421 = vsel %vm389, %v375, 0
        %v424 = vsel %vm389, %v376, 0
        %v427 = vsel %vm389, %v377, 0
        %v430 = vsel %vm389, %v378, 0
        %v433 = vsel %vm389, %v379, 0
        %v436 = vsel %vm389, %v380, 0
        %v439 = vsel %vm389, %v381, 0
        %v442 = vsel %vm389, %v382, 0
        %v445 = vsel %vm389, %v383, 0
        %v448 = vsel %vm389, %v384, 0
        %v451 = vsel %vm389, %v385, 0
        %v454 = vsel %vm389, %v386, 0
        %v457 = vsel %vm389, %v387, 0
        %v460 = vsel %vm389, %v388, 0
        %vm462 = vcmask 1043456
        %v464 = vsel %vm462, %v268, 0
        %466 = vmatprep.subr.bf16.mxu0 0
        %467 = vmatpush1.bf16.msra.mxu0 %v464
        %468 = vmatprep.subr.bf16.mxu0 0
        %469 = vmatpush1.bf16.msra.mxu0 0
        %470 = vmatprep.subr.bf16.mxu0 0
        %471 = vmatpush1.bf16.msra.mxu0 0
        %472 = vmatprep.subr.bf16.mxu0 0
        %473 = vmatpush1.bf16.msra.mxu0 0
        %474 = vmatprep.subr.bf16.mxu0 0
        %475 = vmatpush1.bf16.msra.mxu0 0
        %476 = vmatprep.subr.bf16.mxu0 0
        %477 = vmatpush1.bf16.msra.mxu0 0
        %478 = vmatprep.subr.bf16.mxu0 0
        %479 = vmatpush1.bf16.msra.mxu0 0
        %480 = vmatprep.subr.bf16.mxu0 0
        %481 = vmatpush1.bf16.msra.mxu0 0
        %482 = vmatprep.subr.bf16.mxu0 0
        %483 = vmatpush1.bf16.msra.mxu0 0
        %484 = vmatprep.subr.bf16.mxu0 0
        %485 = vmatpush1.bf16.msra.mxu0 0
        %486 = vmatprep.subr.bf16.mxu0 0
        %487 = vmatpush1.bf16.msra.mxu0 0
        %488 = vmatprep.subr.bf16.mxu0 0
        %489 = vmatpush1.bf16.msra.mxu0 0
        %490 = vmatprep.subr.bf16.mxu0 0
        %491 = vmatpush1.bf16.msra.mxu0 0
        %492 = vmatprep.subr.bf16.mxu0 0
        %493 = vmatpush1.bf16.msra.mxu0 0
        %494 = vmatprep.subr.bf16.mxu0 0
        %495 = vmatpush1.bf16.msra.mxu0 0
        %496 = vmatprep.subr.bf16.mxu0 0
        %497 = vmatpush1.bf16.msra.mxu0 0
        %498 = vmatprep.mubr.bf16.mxu0 0
        %499 = vmatmul.mubr.bf16.gmra.mrb[0].mxu0 %v391
        %v500 = vpop.f32.mrb[0].mxu0
        %v501 = vadd.f32 0.0, %v500
        %v502 = vpop.f32.mrb[0].mxu0
        %v503 = vpop.f32.mrb[0].mxu0
        %v504 = vadd.f32 0.0, %v503
        %v505 = vpop.f32.mrb[0].mxu0
        %506 = vmatprep.mubr.bf16.mxu0 0
        %507 = vmatmul.mubr.bf16.gmra.mrb[0].mxu0 %v394
        %v508 = vpop.f32.mrb[0].mxu0
        %v509 = vadd.f32 0.0, %v508
        %v510 = vpop.f32.mrb[0].mxu0
        %v511 = vpop.f32.mrb[0].mxu0
        %v512 = vadd.f32 0.0, %v511
        %v513 = vpop.f32.mrb[0].mxu0
        %514 = vmatprep.mubr.bf16.mxu0 0
        %515 = vmatmul.mubr.bf16.gmra.mrb[0].mxu0 %v397
        %v516 = vpop.f32.mrb[0].mxu0
        %v517 = vadd.f32 0.0, %v516
        %v518 = vpop.f32.mrb[0].mxu0
        %v519 = vpop.f32.mrb[0].mxu0
        %v520 = vadd.f32 0.0, %v519
        %v521 = vpop.f32.mrb[0].mxu0
        %522 = vmatprep.mubr.bf16.mxu0 0
        %523 = vmatmul.mubr.bf16.gmra.mrb[0].mxu0 %v400
        %v524 = vpop.f32.mrb[0].mxu0
        %v525 = vadd.f32 0.0, %v524
        %v526 = vpop.f32.mrb[0].mxu0
        %v527 = vpop.f32.mrb[0].mxu0
        %v528 = vadd.f32 0.0, %v527
        %v529 = vpop.f32.mrb[0].mxu0
        %530 = vmatprep.mubr.bf16.mxu0 0
        %531 = vmatmul.mubr.bf16.gmra.mrb[0].mxu0 %v403
        %v532 = vpop.f32.mrb[0].mxu0
        %v533 = vadd.f32 0.0, %v532
        %v534 = vpop.f32.mrb[0].mxu0
        %v535 = vpop.f32.mrb[0].mxu0
        %v536 = vadd.f32 0.0, %v535
        %v537 = vpop.f32.mrb[0].mxu0
        %538 = vmatprep.mubr.bf16.mxu0 0
        %539 = vmatmul.mubr.bf16.gmra.mrb[0].mxu0 %v406
        %v540 = vpop.f32.mrb[0].mxu0
        %v541 = vadd.f32 0.0, %v540
        %v542 = vpop.f32.mrb[0].mxu0
        %v543 = vpop.f32.mrb[0].mxu0
        %v544 = vadd.f32 0.0, %v543
        %v545 = vpop.f32.mrb[0].mxu0
        %546 = vmatprep.mubr.bf16.mxu0 0
        %547 = vmatmul.mubr.bf16.gmra.mrb[0].mxu0 %v409
        %v548 = vpop.f32.mrb[0].mxu0
        %v549 = vadd.f32 0.0, %v548
        %v550 = vpop.f32.mrb[0].mxu0
        %v551 = vpop.f32.mrb[0].mxu0
        %v552 = vadd.f32 0.0, %v551
        %v553 = vpop.f32.mrb[0].mxu0
        %554 = vmatprep.mubr.bf16.mxu0 0
        %555 = vmatmul.mubr.bf16.gmra.mrb[0].mxu0 %v412
        %v556 = vpop.f32.mrb[0].mxu0
        %v557 = vadd.f32 0.0, %v556
        %v558 = vpop.f32.mrb[0].mxu0
        %v559 = vpop.f32.mrb[0].mxu0
        %v560 = vadd.f32 0.0, %v559
        %v561 = vpop.f32.mrb[0].mxu0
        %562 = vmatprep.mubr.bf16.mxu0 0
        %563 = vmatmul.mubr.bf16.gmra.mrb[0].mxu0 %v415
        %v564 = vpop.f32.mrb[0].mxu0
        %v565 = vadd.f32 0.0, %v564
        %v566 = vpop.f32.mrb[0].mxu0
        %v567 = vpop.f32.mrb[0].mxu0
        %v568 = vadd.f32 0.0, %v567
        %v569 = vpop.f32.mrb[0].mxu0
        %570 = vmatprep.mubr.bf16.mxu0 0
        %571 = vmatmul.mubr.bf16.gmra.mrb[0].mxu0 %v418
        %v572 = vpop.f32.mrb[0].mxu0
        %v573 = vadd.f32 0.0, %v572
        %v574 = vpop.f32.mrb[0].mxu0
        %v575 = vpop.f32.mrb[0].mxu0
        %v576 = vadd.f32 0.0, %v575
        %v577 = vpop.f32.mrb[0].mxu0
        %578 = vmatprep.mubr.bf16.mxu0 0
        %579 = vmatmul.mubr.bf16.gmra.mrb[0].mxu0 %v421
        %v580 = vpop.f32.mrb[0].mxu0
        %v581 = vadd.f32 0.0, %v580
        %v582 = vpop.f32.mrb[0].mxu0
        %v583 = vpop.f32.mrb[0].mxu0
        %v584 = vadd.f32 0.0, %v583
        %v585 = vpop.f32.mrb[0].mxu0
        %586 = vmatprep.mubr.bf16.mxu0 0
        %587 = vmatmul.mubr.bf16.gmra.mrb[0].mxu0 %v424
        %v588 = vpop.f32.mrb[0].mxu0
        %v589 = vadd.f32 0.0, %v588
        %v590 = vpop.f32.mrb[0].mxu0
        %v591 = vpop.f32.mrb[0].mxu0
        %v592 = vadd.f32 0.0, %v591
        %v593 = vpop.f32.mrb[0].mxu0
        %594 = vmatprep.mubr.bf16.mxu0 0
        %595 = vmatmul.mubr.bf16.gmra.mrb[0].mxu0 %v427
        %v596 = vpop.f32.mrb[0].mxu0
        %v597 = vadd.f32 0.0, %v596
        %v598 = vpop.f32.mrb[0].mxu0
        %v599 = vpop.f32.mrb[0].mxu0
        %v600 = vadd.f32 0.0, %v599
        %v601 = vpop.f32.mrb[0].mxu0
        %602 = vmatprep.mubr.bf16.mxu0 0
        %603 = vmatmul.mubr.bf16.gmra.mrb[0].mxu0 %v430
        %v604 = vpop.f32.mrb[0].mxu0
        %v605 = vadd.f32 0.0, %v604
        %v606 = vpop.f32.mrb[0].mxu0
        %v607 = vpop.f32.mrb[0].mxu0
        %v608 = vadd.f32 0.0, %v607
        %v609 = vpop.f32.mrb[0].mxu0
        %610 = vmatprep.mubr.bf16.mxu0 0
        %611 = vmatmul.mubr.bf16.gmra.mrb[0].mxu0 %v433
        %v612 = vpop.f32.mrb[0].mxu0
        %v613 = vadd.f32 0.0, %v612
        %v614 = vpop.f32.mrb[0].mxu0
        %v615 = vpop.f32.mrb[0].mxu0
        %v616 = vadd.f32 0.0, %v615
        %v617 = vpop.f32.mrb[0].mxu0
        %618 = vmatprep.mubr.bf16.mxu0 0
        %619 = vmatmul.mubr.bf16.gmra.mrb[0].mxu0 %v436
        %v620 = vpop.f32.mrb[0].mxu0
        %v621 = vadd.f32 0.0, %v620
        %v622 = vpop.f32.mrb[0].mxu0
        %v623 = vpop.f32.mrb[0].mxu0
        %v624 = vadd.f32 0.0, %v623
        %v625 = vpop.f32.mrb[0].mxu0
        %626 = vmatprep.mubr.bf16.mxu0 0
        %627 = vmatmul.mubr.bf16.gmra.mrb[0].mxu0 %v439
        %v628 = vpop.f32.mrb[0].mxu0
        %v629 = vadd.f32 0.0, %v628
        %v630 = vpop.f32.mrb[0].mxu0
        %v631 = vpop.f32.mrb[0].mxu0
        %v632 = vadd.f32 0.0, %v631
        %v633 = vpop.f32.mrb[0].mxu0
        %634 = vmatprep.mubr.bf16.mxu0 0
        %635 = vmatmul.mubr.bf16.gmra.mrb[0].mxu0 %v442
        %v636 = vpop.f32.mrb[0].mxu0
        %v637 = vadd.f32 0.0, %v636
        %v638 = vpop.f32.mrb[0].mxu0
        %v639 = vpop.f32.mrb[0].mxu0
        %v640 = vadd.f32 0.0, %v639
        %v641 = vpop.f32.mrb[0].mxu0
        %642 = vmatprep.mubr.bf16.mxu0 0
        %643 = vmatmul.mubr.bf16.gmra.mrb[0].mxu0 %v445
        %v644 = vpop.f32.mrb[0].mxu0
        %v645 = vadd.f32 0.0, %v644
        %v646 = vpop.f32.mrb[0].mxu0
        %v647 = vpop.f32.mrb[0].mxu0
        %v648 = vadd.f32 0.0, %v647
        %v649 = vpop.f32.mrb[0].mxu0
        %650 = vmatprep.mubr.bf16.mxu0 0
        %651 = vmatmul.mubr.bf16.gmra.mrb[0].mxu0 %v448
        %v652 = vpop.f32.mrb[0].mxu0
        %v653 = vadd.f32 0.0, %v652
        %v654 = vpop.f32.mrb[0].mxu0
        %v655 = vpop.f32.mrb[0].mxu0
        %v656 = vadd.f32 0.0, %v655
        %v657 = vpop.f32.mrb[0].mxu0
        %658 = vmatprep.mubr.bf16.mxu0 0
        %659 = vmatmul.mubr.bf16.gmra.mrb[0].mxu0 %v451
        %v660 = vpop.f32.mrb[0].mxu0
        %v661 = vadd.f32 0.0, %v660
        %v662 = vpop.f32.mrb[0].mxu0
        %v663 = vpop.f32.mrb[0].mxu0
        %v664 = vadd.f32 0.0, %v663
        %v665 = vpop.f32.mrb[0].mxu0
        %666 = vmatprep.mubr.bf16.mxu0 0
        %667 = vmatmul.mubr.bf16.gmra.mrb[0].mxu0 %v454
        %v668 = vpop.f32.mrb[0].mxu0
        %v669 = vadd.f32 0.0, %v668
        %v670 = vpop.f32.mrb[0].mxu0
        %v671 = vpop.f32.mrb[0].mxu0
        %v672 = vadd.f32 0.0, %v671
        %v673 = vpop.f32.mrb[0].mxu0
        %674 = vmatprep.mubr.bf16.mxu0 0
        %675 = vmatmul.mubr.bf16.gmra.mrb[0].mxu0 %v457
        %v676 = vpop.f32.mrb[0].mxu0
        %v677 = vadd.f32 0.0, %v676
        %v678 = vpop.f32.mrb[0].mxu0
        %v679 = vpop.f32.mrb[0].mxu0
        %v680 = vadd.f32 0.0, %v679
        %v681 = vpop.f32.mrb[0].mxu0
        %682 = vmatprep.mubr.bf16.mxu0 0
        %683 = vmatmul.mubr.bf16.gmra.mrb[0].mxu0 %v460
        %v684 = vpop.f32.mrb[0].mxu0
        %v685 = vadd.f32 0.0, %v684
        %v686 = vpop.f32.mrb[0].mxu0
        %v687 = vpop.f32.mrb[0].mxu0
        %v688 = vadd.f32 0.0, %v687
        %v689 = vpop.f32.mrb[0].mxu0
        %690 = vdwg.mxu0
        %v691 = vld [vmem:[%s192] sm:$0xff]
        %v692 = vld [vmem:[%s192 + $0x8] sm:$0xf]
        %v693 = vld [vmem:[%s192 + $0xc] sm:$0xff]
        %v694 = vld [vmem:[%s192 + $0x14] sm:$0xf]
        %v695 = vld [vmem:[%s192 + $0x18] sm:$0xff]
        %v696 = vld [vmem:[%s192 + $0x20] sm:$0xf]
        %v697 = vld [vmem:[%s192 + $0x24] sm:$0xff]
        %v698 = vld [vmem:[%s192 + $0x2c] sm:$0xf]
        %v699 = vld [vmem:[%s192 + $0x30] sm:$0xff]
        %v700 = vld [vmem:[%s192 + $0x38] sm:$0xf]
        %v701 = vld [vmem:[%s192 + $0x3c] sm:$0xff]
        %v702 = vld [vmem:[%s192 + $0x44] sm:$0xf]
        %v703 = vld [vmem:[%s192 + $0x48] sm:$0xff]
        %v704 = vld [vmem:[%s192 + $0x50] sm:$0xf]
        %v705 = vld [vmem:[%s192 + $0x54] sm:$0xff]
        %v706 = vld [vmem:[%s192 + $0x5c] sm:$0xf]
        %v707 = vld [vmem:[%s192 + $0x60] sm:$0xff]
        %v708 = vld [vmem:[%s192 + $0x68] sm:$0xf]
        %v709 = vld [vmem:[%s192 + $0x6c] sm:$0xff]
        %v710 = vld [vmem:[%s192 + $0x74] sm:$0xf]
        %v711 = vld [vmem:[%s192 + $0x78] sm:$0xff]
        %v712 = vld [vmem:[%s192 + $0x80] sm:$0xf]
        %v713 = vld [vmem:[%s192 + $0x84] sm:$0xff]
        %v714 = vld [vmem:[%s192 + $0x8c] sm:$0xf]
        %v715 = vld [vmem:[%s192 + $0x90] sm:$0xff]
        %v716 = vld [vmem:[%s192 + $0x98] sm:$0xf]
        %v717 = vld [vmem:[%s192 + $0x9c] sm:$0xff]
        %v718 = vld [vmem:[%s192 + $0xa4] sm:$0xf]
        %v719 = vld [vmem:[%s192 + $0xa8] sm:$0xff]
        %v720 = vld [vmem:[%s192 + $0xb0] sm:$0xf]
        %v721 = vld [vmem:[%s192 + $0xb4] sm:$0xff]
        %v722 = vld [vmem:[%s192 + $0xbc] sm:$0xf]
        %v723 = vld [vmem:[%s192 + $0xc0] sm:$0xff]
        %v724 = vld [vmem:[%s192 + $0xc8] sm:$0xf]
        %v725 = vld [vmem:[%s192 + $0xcc] sm:$0xff]
        %v726 = vld [vmem:[%s192 + $0xd4] sm:$0xf]
        %v727 = vld [vmem:[%s192 + $0xd8] sm:$0xff]
        %v728 = vld [vmem:[%s192 + $0xe0] sm:$0xf]
        %v729 = vld [vmem:[%s192 + $0xe4] sm:$0xff]
        %v730 = vld [vmem:[%s192 + $0xec] sm:$0xf]
        %v731 = vld [vmem:[%s192 + $0xf0] sm:$0xff]
        %v732 = vld [vmem:[%s192 + $0xf8] sm:$0xf]
        %v733 = vld [vmem:[%s192 + $0xfc] sm:$0xff]
        %v734 = vld [vmem:[%s192 + $0x104] sm:$0xf]
        %v735 = vld [vmem:[%s192 + $0x108] sm:$0xff]
        %v736 = vld [vmem:[%s192 + $0x110] sm:$0xf]
        %v737 = vld [vmem:[%s192 + $0x114] sm:$0xff]
        %v738 = vld [vmem:[%s192 + $0x11c] sm:$0xf]
        %v739 = vpack.c.bf16 %v504, %v501
        %v740 = vpack.c.bf16 %v512, %v509
        %v741 = vpack.c.bf16 %v520, %v517
        %v742 = vpack.c.bf16 %v528, %v525
        %v743 = vpack.c.bf16 %v536, %v533
        %v744 = vpack.c.bf16 %v544, %v541
        %v745 = vpack.c.bf16 %v552, %v549
        %v746 = vpack.c.bf16 %v560, %v557
        %v747 = vpack.c.bf16 %v568, %v565
        %v748 = vpack.c.bf16 %v576, %v573
        %v749 = vpack.c.bf16 %v584, %v581
        %v750 = vpack.c.bf16 %v592, %v589
        %v751 = vpack.c.bf16 %v600, %v597
        %v752 = vpack.c.bf16 %v608, %v605
        %v753 = vpack.c.bf16 %v616, %v613
        %v754 = vpack.c.bf16 %v624, %v621
        %v755 = vpack.c.bf16 %v632, %v629
        %v756 = vpack.c.bf16 %v640, %v637
        %v757 = vpack.c.bf16 %v648, %v645
        %v758 = vpack.c.bf16 %v656, %v653
        %v759 = vpack.c.bf16 %v664, %v661
        %v760 = vpack.c.bf16 %v672, %v669
        %v761 = vpack.c.bf16 %v680, %v677
        %v762 = vpack.c.bf16 %v688, %v685
        %v763 = vld [vmem:[%s3] sm:$0x1]
        %v765 = vlaneseq
        %v766 = vshrl.u32 %v765, 7
        %v767 = vsub.s32 0, %v766
        %v768 = vrot.slane %v763, %v767
        %v818 = vunpack.c.l.b16 %v691
        %v819 = vunpack.c.h.b16 %v691
        %v820 = vunpack.c.l.b16 %v692
        %v821 = vunpack.c.l.b16 %v693
        %v822 = vunpack.c.h.b16 %v693
        %v823 = vunpack.c.l.b16 %v694
        %v824 = vunpack.c.l.b16 %v695
        %v825 = vunpack.c.h.b16 %v695
        %v826 = vunpack.c.l.b16 %v696
        %v827 = vunpack.c.l.b16 %v697
        %v828 = vunpack.c.h.b16 %v697
        %v829 = vunpack.c.l.b16 %v698
        %v830 = vunpack.c.l.b16 %v699
        %v831 = vunpack.c.h.b16 %v699
        %v832 = vunpack.c.l.b16 %v700
        %v833 = vunpack.c.l.b16 %v701
        %v834 = vunpack.c.h.b16 %v701
        %v835 = vunpack.c.l.b16 %v702
        %v836 = vunpack.c.l.b16 %v703
        %v837 = vunpack.c.h.b16 %v703
        %v838 = vunpack.c.l.b16 %v704
        %v839 = vunpack.c.l.b16 %v705
        %v840 = vunpack.c.h.b16 %v705
        %v841 = vunpack.c.l.b16 %v706
        %v842 = vunpack.c.l.b16 %v707
        %v843 = vunpack.c.h.b16 %v707
        %v844 = vunpack.c.l.b16 %v708
        %v845 = vunpack.c.l.b16 %v709
        %v846 = vunpack.c.h.b16 %v709
        %v847 = vunpack.c.l.b16 %v710
        %v848 = vunpack.c.l.b16 %v711
        %v849 = vunpack.c.h.b16 %v711
        %v850 = vunpack.c.l.b16 %v712
        %v851 = vunpack.c.l.b16 %v713
        %v852 = vunpack.c.h.b16 %v713
        %v853 = vunpack.c.l.b16 %v714
        %v854 = vunpack.c.l.b16 %v715
        %v855 = vunpack.c.h.b16 %v715
        %v856 = vunpack.c.l.b16 %v716
        %v857 = vunpack.c.l.b16 %v717
        %v858 = vunpack.c.h.b16 %v717
        %v859 = vunpack.c.l.b16 %v718
        %v860 = vunpack.c.l.b16 %v719
        %v861 = vunpack.c.h.b16 %v719
        %v862 = vunpack.c.l.b16 %v720
        %v863 = vunpack.c.l.b16 %v721
        %v864 = vunpack.c.h.b16 %v721
        %v865 = vunpack.c.l.b16 %v722
        %v866 = vunpack.c.l.b16 %v723
        %v867 = vunpack.c.h.b16 %v723
        %v868 = vunpack.c.l.b16 %v724
        %v869 = vunpack.c.l.b16 %v725
        %v870 = vunpack.c.h.b16 %v725
        %v871 = vunpack.c.l.b16 %v726
        %v872 = vunpack.c.l.b16 %v727
        %v873 = vunpack.c.h.b16 %v727
        %v874 = vunpack.c.l.b16 %v728
        %v875 = vunpack.c.l.b16 %v729
        %v876 = vunpack.c.h.b16 %v729
        %v877 = vunpack.c.l.b16 %v730
        %v878 = vunpack.c.l.b16 %v731
        %v879 = vunpack.c.h.b16 %v731
        %v880 = vunpack.c.l.b16 %v732
        %v881 = vunpack.c.l.b16 %v733
        %v882 = vunpack.c.h.b16 %v733
        %v883 = vunpack.c.l.b16 %v734
        %v884 = vunpack.c.l.b16 %v735
        %v885 = vunpack.c.h.b16 %v735
        %v886 = vunpack.c.l.b16 %v736
        %v887 = vunpack.c.l.b16 %v737
        %v888 = vunpack.c.h.b16 %v737
        %v889 = vunpack.c.l.b16 %v738
        %v890 = vpack.c.b16 %v821, %v818
        %v891 = vpack.c.b16 %v822, %v819
        %v892 = vpack.c.b16 %v823, %v820
        %v893 = vpack.c.b16 %v827, %v824
        %v894 = vpack.c.b16 %v828, %v825
        %v895 = vpack.c.b16 %v829, %v826
        %v896 = vpack.c.b16 %v833, %v830
        %v897 = vpack.c.b16 %v834, %v831
        %v898 = vpack.c.b16 %v835, %v832
        %v899 = vpack.c.b16 %v839, %v836
        %v900 = vpack.c.b16 %v840, %v837
        %v901 = vpack.c.b16 %v841, %v838
        %v902 = vpack.c.b16 %v845, %v842
        %v903 = vpack.c.b16 %v846, %v843
        %v904 = vpack.c.b16 %v847, %v844
        %v905 = vpack.c.b16 %v851, %v848
        %v906 = vpack.c.b16 %v852, %v849
        %v907 = vpack.c.b16 %v853, %v850
        %v908 = vpack.c.b16 %v857, %v854
        %v909 = vpack.c.b16 %v858, %v855
        %v910 = vpack.c.b16 %v859, %v856
        %v911 = vpack.c.b16 %v863, %v860
        %v912 = vpack.c.b16 %v864, %v861
        %v913 = vpack.c.b16 %v865, %v862
        %v914 = vpack.c.b16 %v869, %v866
        %v915 = vpack.c.b16 %v870, %v867
        %v916 = vpack.c.b16 %v871, %v868
        %v917 = vpack.c.b16 %v875, %v872
        %v918 = vpack.c.b16 %v876, %v873
        %v919 = vpack.c.b16 %v877, %v874
        %v920 = vpack.c.b16 %v881, %v878
        %v921 = vpack.c.b16 %v882, %v879
        %v922 = vpack.c.b16 %v883, %v880
        %v923 = vpack.c.b16 %v887, %v884
        %v924 = vpack.c.b16 %v888, %v885
        %v925 = vpack.c.b16 %v889, %v886
        %962 = vmatprep.subr.bf16.mxu0 0
        %963 = vmatpush1.bf16.msra.mxu0 %v739
        %964 = vmatprep.subr.bf16.mxu0 0
        %965 = vmatpush1.bf16.msra.mxu0 %v740
        %966 = vmatprep.subr.bf16.mxu0 0
        %967 = vmatpush1.bf16.msra.mxu0 %v741
        %968 = vmatprep.subr.bf16.mxu0 0
        %969 = vmatpush1.bf16.msra.mxu0 %v742
        %970 = vmatprep.subr.bf16.mxu0 0
        %971 = vmatpush1.bf16.msra.mxu0 %v743
        %972 = vmatprep.subr.bf16.mxu0 0
        %973 = vmatpush1.bf16.msra.mxu0 %v744
        %974 = vmatprep.subr.bf16.mxu0 0
        %975 = vmatpush1.bf16.msra.mxu0 %v745
        %976 = vmatprep.subr.bf16.mxu0 0
        %977 = vmatpush1.bf16.msra.mxu0 %v746
        %978 = vmatprep.subr.bf16.mxu0 0
        %979 = vmatpush1.bf16.msra.mxu0 %v747
        %980 = vmatprep.subr.bf16.mxu0 0
        %981 = vmatpush1.bf16.msra.mxu0 %v748
        %982 = vmatprep.subr.bf16.mxu0 0
        %983 = vmatpush1.bf16.msra.mxu0 %v749
        %984 = vmatprep.subr.bf16.mxu0 0
        %985 = vmatpush1.bf16.msra.mxu0 %v750
        %986 = vmatprep.subr.bf16.mxu0 0
        %987 = vmatpush1.bf16.msra.mxu0 %v751
        %988 = vmatprep.subr.bf16.mxu0 0
        %989 = vmatpush1.bf16.msra.mxu0 %v752
        %990 = vmatprep.subr.bf16.mxu0 0
        %991 = vmatpush1.bf16.msra.mxu0 %v753
        %992 = vmatprep.subr.bf16.mxu0 0
        %993 = vmatpush1.bf16.msra.mxu0 %v754
        %994 = vmatprep.mubr.bf16.mxu0 %v891
        %995 = vmatmul.mubr.bf16.gmra.mrb[0].mxu0 %v890
        %v996 = vpop.f32.mrb[0].mxu0
        %v997 = vadd.f32 %v768, %v996
        %v998 = vpop.f32.mrb[0].mxu0
        %v999 = vpop.f32.mrb[0].mxu0
        %v1000 = vadd.f32 %v768, %v999
        %v1001 = vpop.f32.mrb[0].mxu0
        %1002 = vmatprep.mubr.bf16.mxu0 %v894
        %1003 = vmatmul.mubr.bf16.gmra.mrb[0].mxu0 %v893
        %v1004 = vpop.f32.mrb[0].mxu0
        %v1005 = vadd.f32 %v768, %v1004
        %v1006 = vpop.f32.mrb[0].mxu0
        %v1007 = vpop.f32.mrb[0].mxu0
        %v1008 = vadd.f32 %v768, %v1007
        %v1009 = vpop.f32.mrb[0].mxu0
        %1010 = vmatprep.mubr.bf16.mxu0 %v897
        %1011 = vmatmul.mubr.bf16.gmra.mrb[0].mxu0 %v896
        %v1012 = vpop.f32.mrb[0].mxu0
        %v1013 = vadd.f32 %v768, %v1012
        %v1014 = vpop.f32.mrb[0].mxu0
        %v1015 = vpop.f32.mrb[0].mxu0
        %v1016 = vadd.f32 %v768, %v1015
        %v1017 = vpop.f32.mrb[0].mxu0
        %1018 = vmatprep.mubr.bf16.mxu0 %v900
        %1019 = vmatmul.mubr.bf16.gmra.mrb[0].mxu0 %v899
        %v1020 = vpop.f32.mrb[0].mxu0
        %v1021 = vadd.f32 %v768, %v1020
        %v1022 = vpop.f32.mrb[0].mxu0
        %v1023 = vpop.f32.mrb[0].mxu0
        %v1024 = vadd.f32 %v768, %v1023
        %v1025 = vpop.f32.mrb[0].mxu0
        %1026 = vmatprep.mubr.bf16.mxu0 %v903
        %1027 = vmatmul.mubr.bf16.gmra.mrb[0].mxu0 %v902
        %v1028 = vpop.f32.mrb[0].mxu0
        %v1029 = vadd.f32 %v768, %v1028
        %v1030 = vpop.f32.mrb[0].mxu0
        %v1031 = vpop.f32.mrb[0].mxu0
        %v1032 = vadd.f32 %v768, %v1031
        %v1033 = vpop.f32.mrb[0].mxu0
        %1034 = vmatprep.mubr.bf16.mxu0 %v906
        %1035 = vmatmul.mubr.bf16.gmra.mrb[0].mxu0 %v905
        %v1036 = vpop.f32.mrb[0].mxu0
        %v1037 = vadd.f32 %v768, %v1036
        %v1038 = vpop.f32.mrb[0].mxu0
        %v1039 = vpop.f32.mrb[0].mxu0
        %v1040 = vadd.f32 %v768, %v1039
        %v1041 = vpop.f32.mrb[0].mxu0
        %1042 = vmatprep.mubr.bf16.mxu0 %v909
        %1043 = vmatmul.mubr.bf16.gmra.mrb[0].mxu0 %v908
        %v1044 = vpop.f32.mrb[0].mxu0
        %v1045 = vadd.f32 %v768, %v1044
        %v1046 = vpop.f32.mrb[0].mxu0
        %v1047 = vpop.f32.mrb[0].mxu0
        %v1048 = vadd.f32 %v768, %v1047
        %v1049 = vpop.f32.mrb[0].mxu0
        %1050 = vmatprep.mubr.bf16.mxu0 %v912
        %1051 = vmatmul.mubr.bf16.gmra.mrb[0].mxu0 %v911
        %v1052 = vpop.f32.mrb[0].mxu0
        %v1053 = vadd.f32 %v768, %v1052
        %v1054 = vpop.f32.mrb[0].mxu0
        %v1055 = vpop.f32.mrb[0].mxu0
        %v1056 = vadd.f32 %v768, %v1055
        %v1057 = vpop.f32.mrb[0].mxu0
        %1058 = vmatprep.mubr.bf16.mxu0 %v915
        %1059 = vmatmul.mubr.bf16.gmra.mrb[0].mxu0 %v914
        %v1060 = vpop.f32.mrb[0].mxu0
        %v1061 = vadd.f32 %v768, %v1060
        %v1062 = vpop.f32.mrb[0].mxu0
        %v1063 = vpop.f32.mrb[0].mxu0
        %v1064 = vadd.f32 %v768, %v1063
        %v1065 = vpop.f32.mrb[0].mxu0
        %1066 = vmatprep.mubr.bf16.mxu0 %v918
        %1067 = vmatmul.mubr.bf16.gmra.mrb[0].mxu0 %v917
        %v1068 = vpop.f32.mrb[0].mxu0
        %v1069 = vadd.f32 %v768, %v1068
        %v1070 = vpop.f32.mrb[0].mxu0
        %v1071 = vpop.f32.mrb[0].mxu0
        %v1072 = vadd.f32 %v768, %v1071
        %v1073 = vpop.f32.mrb[0].mxu0
        %1074 = vmatprep.mubr.bf16.mxu0 %v921
        %1075 = vmatmul.mubr.bf16.gmra.mrb[0].mxu0 %v920
        %v1076 = vpop.f32.mrb[0].mxu0
        %v1077 = vadd.f32 %v768, %v1076
        %v1078 = vpop.f32.mrb[0].mxu0
        %v1079 = vpop.f32.mrb[0].mxu0
        %v1080 = vadd.f32 %v768, %v1079
        %v1081 = vpop.f32.mrb[0].mxu0
        %1082 = vmatprep.mubr.bf16.mxu0 %v924
        %1083 = vmatmul.mubr.bf16.gmra.mrb[0].mxu0 %v923
        %v1084 = vpop.f32.mrb[0].mxu0
        %v1085 = vadd.f32 %v768, %v1084
        %v1086 = vpop.f32.mrb[0].mxu0
        %v1087 = vpop.f32.mrb[0].mxu0
        %v1088 = vadd.f32 %v768, %v1087
        %v1089 = vpop.f32.mrb[0].mxu0
        %1090 = vdwg.mxu0
        %1091 = vmatprep.subr.bf16.mxu0 0
        %1092 = vmatpush1.bf16.msra.mxu0 %v755
        %1093 = vmatprep.subr.bf16.mxu0 0
        %1094 = vmatpush1.bf16.msra.mxu0 %v756
        %1095 = vmatprep.subr.bf16.mxu0 0
        %1096 = vmatpush1.bf16.msra.mxu0 %v757
        %1097 = vmatprep.subr.bf16.mxu0 0
        %1098 = vmatpush1.bf16.msra.mxu0 %v758
        %1099 = vmatprep.subr.bf16.mxu0 0
        %1100 = vmatpush1.bf16.msra.mxu0 %v759
        %1101 = vmatprep.subr.bf16.mxu0 0
        %1102 = vmatpush1.bf16.msra.mxu0 %v760
        %1103 = vmatprep.subr.bf16.mxu0 0
        %1104 = vmatpush1.bf16.msra.mxu0 %v761
        %1105 = vmatprep.subr.bf16.mxu0 0
        %1106 = vmatpush1.bf16.msra.mxu0 %v762
        %1107 = vmatprep.subr.bf16.mxu0 0
        %1108 = vmatpush1.bf16.msra.mxu0 0
        %1109 = vmatprep.subr.bf16.mxu0 0
        %1110 = vmatpush1.bf16.msra.mxu0 0
        %1111 = vmatprep.subr.bf16.mxu0 0
        %1112 = vmatpush1.bf16.msra.mxu0 0
        %1113 = vmatprep.subr.bf16.mxu0 0
        %1114 = vmatpush1.bf16.msra.mxu0 0
        %1115 = vmatprep.subr.bf16.mxu0 0
        %1116 = vmatpush1.bf16.msra.mxu0 0
        %1117 = vmatprep.subr.bf16.mxu0 0
        %1118 = vmatpush1.bf16.msra.mxu0 0
        %1119 = vmatprep.subr.bf16.mxu0 0
        %1120 = vmatpush1.bf16.msra.mxu0 0
        %1121 = vmatprep.subr.bf16.mxu0 0
        %1122 = vmatpush1.bf16.msra.mxu0 0
        %1123 = vmatprep.mubr.bf16.mxu0 0
        %1124 = vmatmul.mubr.bf16.gmra.mrb[0].mxu0 %v892
        %v1125 = vpop.f32.mrb[0].mxu0
        %v1126 = vadd.f32 %v997, %v1125
        %v1127 = vpop.f32.mrb[0].mxu0
        %v1128 = vpop.f32.mrb[0].mxu0
        %v1129 = vadd.f32 %v1000, %v1128
        %v1130 = vpop.f32.mrb[0].mxu0
        %1131 = vmatprep.mubr.bf16.mxu0 0
        %1132 = vmatmul.mubr.bf16.gmra.mrb[0].mxu0 %v895
        %v1133 = vpop.f32.mrb[0].mxu0
        %v1134 = vadd.f32 %v1005, %v1133
        %v1135 = vpop.f32.mrb[0].mxu0
        %v1136 = vpop.f32.mrb[0].mxu0
        %v1137 = vadd.f32 %v1008, %v1136
        %v1138 = vpop.f32.mrb[0].mxu0
        %1139 = vmatprep.mubr.bf16.mxu0 0
        %1140 = vmatmul.mubr.bf16.gmra.mrb[0].mxu0 %v898
        %v1141 = vpop.f32.mrb[0].mxu0
        %v1142 = vadd.f32 %v1013, %v1141
        %v1143 = vpop.f32.mrb[0].mxu0
        %v1144 = vpop.f32.mrb[0].mxu0
        %v1145 = vadd.f32 %v1016, %v1144
        %v1146 = vpop.f32.mrb[0].mxu0
        %1147 = vmatprep.mubr.bf16.mxu0 0
        %1148 = vmatmul.mubr.bf16.gmra.mrb[0].mxu0 %v901
        %v1149 = vpop.f32.mrb[0].mxu0
        %v1150 = vadd.f32 %v1021, %v1149
        %v1151 = vpop.f32.mrb[0].mxu0
        %v1152 = vpop.f32.mrb[0].mxu0
        %v1153 = vadd.f32 %v1024, %v1152
        %v1154 = vpop.f32.mrb[0].mxu0
        %1155 = vmatprep.mubr.bf16.mxu0 0
        %1156 = vmatmul.mubr.bf16.gmra.mrb[0].mxu0 %v904
        %v1157 = vpop.f32.mrb[0].mxu0
        %v1158 = vadd.f32 %v1029, %v1157
        %v1159 = vpop.f32.mrb[0].mxu0
        %v1160 = vpop.f32.mrb[0].mxu0
        %v1161 = vadd.f32 %v1032, %v1160
        %v1162 = vpop.f32.mrb[0].mxu0
        %1163 = vmatprep.mubr.bf16.mxu0 0
        %1164 = vmatmul.mubr.bf16.gmra.mrb[0].mxu0 %v907
        %v1165 = vpop.f32.mrb[0].mxu0
        %v1166 = vadd.f32 %v1037, %v1165
        %v1167 = vpop.f32.mrb[0].mxu0
        %v1168 = vpop.f32.mrb[0].mxu0
        %v1169 = vadd.f32 %v1040, %v1168
        %v1170 = vpop.f32.mrb[0].mxu0
        %1171 = vmatprep.mubr.bf16.mxu0 0
        %1172 = vmatmul.mubr.bf16.gmra.mrb[0].mxu0 %v910
        %v1173 = vpop.f32.mrb[0].mxu0
        %v1174 = vadd.f32 %v1045, %v1173
        %v1175 = vpop.f32.mrb[0].mxu0
        %v1176 = vpop.f32.mrb[0].mxu0
        %v1177 = vadd.f32 %v1048, %v1176
        %v1178 = vpop.f32.mrb[0].mxu0
        %1179 = vmatprep.mubr.bf16.mxu0 0
        %1180 = vmatmul.mubr.bf16.gmra.mrb[0].mxu0 %v913
        %v1181 = vpop.f32.mrb[0].mxu0
        %v1182 = vadd.f32 %v1053, %v1181
        %v1183 = vpop.f32.mrb[0].mxu0
        %v1184 = vpop.f32.mrb[0].mxu0
        %v1185 = vadd.f32 %v1056, %v1184
        %v1186 = vpop.f32.mrb[0].mxu0
        %1187 = vmatprep.mubr.bf16.mxu0 0
        %1188 = vmatmul.mubr.bf16.gmra.mrb[0].mxu0 %v916
        %v1189 = vpop.f32.mrb[0].mxu0
        %v1190 = vadd.f32 %v1061, %v1189
        %v1191 = vpop.f32.mrb[0].mxu0
        %v1192 = vpop.f32.mrb[0].mxu0
        %v1193 = vadd.f32 %v1064, %v1192
        %v1194 = vpop.f32.mrb[0].mxu0
        %1195 = vmatprep.mubr.bf16.mxu0 0
        %1196 = vmatmul.mubr.bf16.gmra.mrb[0].mxu0 %v919
        %v1197 = vpop.f32.mrb[0].mxu0
        %v1198 = vadd.f32 %v1069, %v1197
        %v1199 = vpop.f32.mrb[0].mxu0
        %v1200 = vpop.f32.mrb[0].mxu0
        %v1201 = vadd.f32 %v1072, %v1200
        %v1202 = vpop.f32.mrb[0].mxu0
        %1203 = vmatprep.mubr.bf16.mxu0 0
        %1204 = vmatmul.mubr.bf16.gmra.mrb[0].mxu0 %v922
        %v1205 = vpop.f32.mrb[0].mxu0
        %v1206 = vadd.f32 %v1077, %v1205
        %v1207 = vpop.f32.mrb[0].mxu0
        %v1208 = vpop.f32.mrb[0].mxu0
        %v1209 = vadd.f32 %v1080, %v1208
        %v1210 = vpop.f32.mrb[0].mxu0
        %1211 = vmatprep.mubr.bf16.mxu0 0
        %1212 = vmatmul.mubr.bf16.gmra.mrb[0].mxu0 %v925
        %v1213 = vpop.f32.mrb[0].mxu0
        %v1214 = vadd.f32 %v1085, %v1213
        %v1215 = vpop.f32.mrb[0].mxu0
        %v1216 = vpop.f32.mrb[0].mxu0
        %v1217 = vadd.f32 %v1088, %v1216
        %v1218 = vpop.f32.mrb[0].mxu0
        %1219 = vdwg.mxu0
        %v1220 = vmax.f32 %v1126, 0.0
        %v1221 = vmax.f32 %v1129, 0.0
        %v1222 = vmax.f32 %v1134, 0.0
        %v1223 = vmax.f32 %v1137, 0.0
        %v1224 = vmax.f32 %v1142, 0.0
        %v1225 = vmax.f32 %v1145, 0.0
        %v1226 = vmax.f32 %v1150, 0.0
        %v1227 = vmax.f32 %v1153, 0.0
        %v1228 = vmax.f32 %v1158, 0.0
        %v1229 = vmax.f32 %v1161, 0.0
        %v1230 = vmax.f32 %v1166, 0.0
        %v1231 = vmax.f32 %v1169, 0.0
        %v1232 = vmax.f32 %v1174, 0.0
        %v1233 = vmax.f32 %v1177, 0.0
        %v1234 = vmax.f32 %v1182, 0.0
        %v1235 = vmax.f32 %v1185, 0.0
        %v1236 = vmax.f32 %v1190, 0.0
        %v1237 = vmax.f32 %v1193, 0.0
        %v1238 = vmax.f32 %v1198, 0.0
        %v1239 = vmax.f32 %v1201, 0.0
        %v1240 = vmax.f32 %v1206, 0.0
        %v1241 = vmax.f32 %v1209, 0.0
        %v1242 = vmax.f32 %v1214, 0.0
        %v1243 = vmax.f32 %v1217, 0.0
        %v1244 = vpack.c.bf16 %v1221, %v1220
        %v1245 = vpack.c.bf16 %v1223, %v1222
        %v1246 = vpack.c.bf16 %v1225, %v1224
        %v1247 = vpack.c.bf16 %v1227, %v1226
        %v1248 = vpack.c.bf16 %v1229, %v1228
        %v1249 = vpack.c.bf16 %v1231, %v1230
        %v1250 = vpack.c.bf16 %v1233, %v1232
        %v1251 = vpack.c.bf16 %v1235, %v1234
        %v1252 = vpack.c.bf16 %v1237, %v1236
        %v1253 = vpack.c.bf16 %v1239, %v1238
        %v1254 = vpack.c.bf16 %v1241, %v1240
        %v1255 = vpack.c.bf16 %v1243, %v1242
        %v1268 = vunpack.c.l.b16 %v1244
        %v1269 = vunpack.c.h.b16 %v1244
        %v1270 = vunpack.c.l.b16 %v1245
        %v1271 = vunpack.c.h.b16 %v1245
        %v1272 = vunpack.c.l.b16 %v1246
        %v1273 = vunpack.c.h.b16 %v1246
        %v1274 = vunpack.c.l.b16 %v1247
        %v1275 = vunpack.c.h.b16 %v1247
        %v1276 = vunpack.c.l.b16 %v1248
        %v1277 = vunpack.c.h.b16 %v1248
        %v1278 = vunpack.c.l.b16 %v1249
        %v1279 = vunpack.c.h.b16 %v1249
        %v1280 = vunpack.c.l.b16 %v1250
        %v1281 = vunpack.c.h.b16 %v1250
        %v1282 = vunpack.c.l.b16 %v1251
        %v1283 = vunpack.c.h.b16 %v1251
        %v1284 = vunpack.c.l.b16 %v1252
        %v1285 = vunpack.c.h.b16 %v1252
        %v1286 = vunpack.c.l.b16 %v1253
        %v1287 = vunpack.c.h.b16 %v1253
        %v1288 = vunpack.c.l.b16 %v1254
        %v1289 = vunpack.c.h.b16 %v1254
        %v1290 = vunpack.c.l.b16 %v1255
        %v1291 = vunpack.c.h.b16 %v1255
        %v1292 = vpack.c.b16 %v1268, %v1268
        %v1293 = vpack.c.b16 %v1269, %v1269
        %v1294 = vpack.c.b16 %v1270, %v1270
        %v1295 = vpack.c.b16 %v1271, %v1271
        %v1296 = vpack.c.b16 %v1272, %v1272
        %v1297 = vpack.c.b16 %v1273, %v1273
        %v1298 = vpack.c.b16 %v1274, %v1274
        %v1299 = vpack.c.b16 %v1275, %v1275
        %v1300 = vpack.c.b16 %v1276, %v1276
        %v1301 = vpack.c.b16 %v1277, %v1277
        %v1302 = vpack.c.b16 %v1278, %v1278
        %v1303 = vpack.c.b16 %v1279, %v1279
        %v1304 = vpack.c.b16 %v1280, %v1280
        %v1305 = vpack.c.b16 %v1281, %v1281
        %v1306 = vpack.c.b16 %v1282, %v1282
        %v1307 = vpack.c.b16 %v1283, %v1283
        %v1308 = vpack.c.b16 %v1284, %v1284
        %v1309 = vpack.c.b16 %v1285, %v1285
        %v1310 = vpack.c.b16 %v1286, %v1286
        %v1311 = vpack.c.b16 %v1287, %v1287
        %v1312 = vpack.c.b16 %v1288, %v1288
        %v1313 = vpack.c.b16 %v1289, %v1289
        %v1314 = vpack.c.b16 %v1290, %v1290
        %v1315 = vpack.c.b16 %v1291, %v1291
        %1340 = vst [vmem:[%s216] sm:$0xf] %v1292
        %1341 = vst [vmem:[%s216 + $0x4] sm:$0xf] %v1293
        %1342 = vst [vmem:[%s216 + $0x8] sm:$0xf] %v1294
        %1343 = vst [vmem:[%s216 + $0xc] sm:$0xf] %v1295
        %1344 = vst [vmem:[%s216 + $0x10] sm:$0xf] %v1296
        %1345 = vst [vmem:[%s216 + $0x14] sm:$0xf] %v1297
        %1346 = vst [vmem:[%s216 + $0x18] sm:$0xf] %v1298
        %1347 = vst [vmem:[%s216 + $0x1c] sm:$0xf] %v1299
        %1348 = vst [vmem:[%s216 + $0x20] sm:$0xf] %v1300
        %1349 = vst [vmem:[%s216 + $0x24] sm:$0xf] %v1301
        %1350 = vst [vmem:[%s216 + $0x28] sm:$0xf] %v1302
        %1351 = vst [vmem:[%s216 + $0x2c] sm:$0xf] %v1303
        %1352 = vst [vmem:[%s216 + $0x30] sm:$0xf] %v1304
        %1353 = vst [vmem:[%s216 + $0x34] sm:$0xf] %v1305
        %1354 = vst [vmem:[%s216 + $0x38] sm:$0xf] %v1306
        %1355 = vst [vmem:[%s216 + $0x3c] sm:$0xf] %v1307
        %1356 = vst [vmem:[%s216 + $0x40] sm:$0xf] %v1308
        %1357 = vst [vmem:[%s216 + $0x44] sm:$0xf] %v1309
        %1358 = vst [vmem:[%s216 + $0x48] sm:$0xf] %v1310
        %1359 = vst [vmem:[%s216 + $0x4c] sm:$0xf] %v1311
        %1360 = vst [vmem:[%s216 + $0x50] sm:$0xf] %v1312
        %1361 = vst [vmem:[%s216 + $0x54] sm:$0xf] %v1313
        %1362 = vst [vmem:[%s216 + $0x58] sm:$0xf] %v1314
        %1363 = vst [vmem:[%s216 + $0x5c] sm:$0xf] %v1315
        %s1364 = sand.u32 %s118, 1
        %s1365 = scalar_lea.sflag [#allocation4], %s1364
        %s1366 = sand.u32 %s118, 1
        %s1367 = smul.addr %s1366, 96
        %s1368 = scalar_lea.vmem [#allocation5], %s1367
        // Predicated region
        $region41: #{tpu_custom_call.1} parent=35 // pred_check
          %p1369 = pneg %p128
        $region42: #{tpu_custom_call.1} parent=35 // pred_check_branch
          %1371 = sbr.rel (%p1369) target = $region44
        $region43: #{tpu_custom_call.1} parent=35 // pred_region
          %s1372 = smul.u32 24, %s21
          %s1374 = ssub.s32 1536, 1536
          %1375 = vsyncadd %s1365, %s1374
          %s1376 = smul.addr %s1372, 64
          %s1377 = scalar_lea.hbm %s4, %s1376
          %s1378 = sshll.u32 %s1368, 4
          %s1379 = int_to_ptr.vmem [resolvable:$true] %s1378
          %1384 = dma.vmem_to_hbm [thread:$0]  %s1379, 1536, %s1377, %s1365, 64, 64, 4
        $region44: #{tpu_custom_call.1} parent=35 // pred_fallthru
          _
      $region36: #{tpu_custom_call.1} parent=5 // pred_fallthru
        _
      %p1385 = scmp.le.s32.totalorder 2, %s16
      // Predicated region
      $region45: #{tpu_custom_call.1} parent=5 // pred_check
        %p1386 = pneg %p1385
      $region46: #{tpu_custom_call.1} parent=5 // pred_check_branch
        %1388 = sbr.rel (%p1386) target = $region48
      $region47: #{tpu_custom_call.1} parent=5 // pred_region
        %s1389 = ssub.s32 %s16, 2
        // Predicated region
        $region49: #{tpu_custom_call.1} parent=47 // pred_check
          %p1390 = pneg %p134
        $region50: #{tpu_custom_call.1} parent=47 // pred_check_branch
          %1392 = sbr.rel (%p1390) target = $region52
        $region51: #{tpu_custom_call.1} parent=47 // pred_region
          %s1393 = sand.u32 %s119, 1
          %s1394 = scalar_lea.sflag [#allocation4], %s1393
          %s1395 = sand.u32 %s119, 1
          %s1396 = smul.addr %s1395, 96
          %s1397 = scalar_lea.vmem [#allocation5], %s1396
          %1398 = dma.done %s1394, 1536
        $region52: #{tpu_custom_call.1} parent=47 // pred_fallthru
          _
      $region48: #{tpu_custom_call.1} parent=5 // pred_fallthru
        _
    $region6: #{tpu_custom_call.1} parent=1 // loop_footer
      %s20 = sadd.s32 1, %s16
    $region7: #{tpu_custom_call.1} parent=1 // loop_footer_branch
      %15 = sbr.rel target = $region3
    $region8: #{tpu_custom_call.1} parent=1 // loop_exit
      _
    %1399 = vsyncpa [#allocation3], 1
    %s1400 = scalar_lea.sflag [#allocation3], 1
    %1401 = vsyncpa %s1400, 1
    %1402 = vsyncpa [#allocation4], 1
    %s1403 = scalar_lea.sflag [#allocation4], 1
    %1404 = vsyncpa %s1403, 1

</llo_original>
